<compile_context>
chip_gen: v5e
topology: v5e:2x2
jax: 0.10.0
libtpu: 0.0.40
codegen_flags: <defaults>
</compile_context>

<pallas_src>
import functools
import math

import jax
import jax.numpy as jnp
from jax.experimental import pallas as pl
from jax.experimental.pallas import tpu as pltpu

D_MODEL = 32
NHEAD = 4
HEAD_DIM = D_MODEL // NHEAD
FFN_DIM = 4 * D_MODEL
EPS = 1e-5  # PyTorch LayerNorm default


def _layernorm(x, gamma, beta):
    mean = jnp.mean(x, axis=-1, keepdims=True)
    var = jnp.mean((x - mean) ** 2, axis=-1, keepdims=True)
    return (x - mean) * jax.lax.rsqrt(var + EPS) * gamma + beta


def cross_attention_kernel(ts_ref, wqkv_ref, wo_ref, w1_ref, w2_ref,
                           vec_ref, bqkv_ref, b1_ref,
                           mask_ref, sumT_ref, hsel_ref,
                           out_ref, attw_ref, *, sub, r0, seq):
    """One grid step = `sub` sub-tiles of r0 = bt0*seq rows each (rows = sub*r0)."""
    ts = ts_ref[...]                          # (rows, 2d) = [tar | src] flattened rows
    src = ts[:, D_MODEL:]                     # (rows, d) residual stream (kv side, per PyTorch)

    # packed d-wide vectors: [bo, b2, g1, be1, g2, be2, pad, pad]
    bo = vec_ref[0:1, :]
    b2 = vec_ref[1:2, :]
    g1 = vec_ref[2:3, :]
    be1 = vec_ref[3:4, :]
    g2 = vec_ref[4:5, :]
    be2 = vec_ref[5:6, :]

    # ---- fused Q/K/V projection (Wq, bq pre-scaled by 1/sqrt(head_dim)) --------------
    qkv = jnp.dot(ts, wqkv_ref[...], preferred_element_type=jnp.float32) + bqkv_ref[...]
    q = qkv[:, :D_MODEL]                      # (rows, d)
    k = qkv[:, D_MODEL:2 * D_MODEL]           # (rows, d)
    v = qkv[:, 2 * D_MODEL:]                  # (rows, d)

    mask_add = mask_ref[...]                  # (r0, r0)   0 on same-batch block, -1e30 off
    sum_t = sumT_ref[...]                     # (seq, r0)  1/NHEAD at matching key position
    hsel = hsel_ref[...]                      # (NHEAD, d) 1.0 on that head's columns

    ctx_parts = []
    for s_i in range(sub):                    # static, unrolled
        lo = s_i * r0
        qs = q[lo:lo + r0, :]
        ks = k[lo:lo + r0, :]
        vs = v[lo:lo + r0, :]
        ctx = jnp.zeros((r0, D_MODEL), jnp.float32)
        attw_t = jnp.zeros((seq, r0), jnp.float32)
        for h in range(NHEAD):                # static, 4 iters; all ops on full tiles
            sel = hsel[h:h + 1, :]
            # per-head scores: zero out other heads' lanes of q, contract over all d lanes
            sc = jax.lax.dot_general(qs * sel, ks, (((1,), (1,)), ((), ())),
                                     preferred_element_type=jnp.float32) + mask_add
            sc = sc - jnp.max(sc, axis=-1, keepdims=True)
            e = jnp.exp(sc)                   # exactly 0 off the batch diagonal
            denom = jnp.sum(e, axis=-1, keepdims=True)
            r = pl.reciprocal(denom, approx=True)
            r = r * (2.0 - denom * r)         # one Newton step -> ~f32 accuracy
            p = e * r                         # per-head softmax, (r0, r0)
            ctx = ctx + jnp.dot(p, vs * sel, preferred_element_type=jnp.float32)
            # transposed attention-weight extraction: (seq, r0) += sum_t · p^T (trans_b)
            attw_t = attw_t + jax.lax.dot_general(sum_t, p, (((1,), (1,)), ((), ())),
                                                  preferred_element_type=jnp.float32)
        attw_ref[0, :, lo:lo + r0] = attw_t   # lane-dense (seq, r0) store, no transpose
        ctx_parts.append(ctx)
    ctx = ctx_parts[0] if sub == 1 else jnp.concatenate(ctx_parts, axis=0)   # (rows, d)

    # ---- output projection, residual + norm1, FFN, residual + norm2 ------------------
    attn_out = jnp.dot(ctx, wo_ref[...], preferred_element_type=jnp.float32) + bo
    x = _layernorm(src + attn_out, g1, be1)
    h1 = jnp.maximum(
        jnp.dot(x, w1_ref[...], preferred_element_type=jnp.float32) + b1_ref[...], 0.0)
    y = jnp.dot(h1, w2_ref[...], preferred_element_type=jnp.float32) + b2
    x = _layernorm(x + y, g2, be2)

    out_ref[0] = x.T                          # lane-dense (d, rows) store


def _const_spec(shape):
    nd = len(shape)
    return pl.BlockSpec(shape, lambda g, _nd=nd: (0,) * _nd)


def _choose_blocking(B, T):
    """Return (bt0 = batch elems per ~128-row sub-tile, sub = sub-tiles per grid step)."""
    if B * T <= 128:
        return B, 1                                   # one full-array block, always legal
    if T <= 128 and 128 % T == 0:
        bt0 = 128 // T                                # exact 128-row sub-tiles
        n_sub = -(-B // bt0)
        g_target = max(2, -(-n_sub // 4))             # amortize steps, keep G >= 2 (v7x)
        sub = max(1, -(-n_sub // g_target))
        return bt0, sub
    # general T: one sub-tile per step with rows % 8 == 0
    step = 8 // math.gcd(T, 8)
    bt0 = max(step, (max(1, 128 // T) // step) * step)
    return bt0, 1


def cross_attention(tar, src, params, *, block_cfg=None):
    """tar, src: (B, d_model, T) float32 -> (out (B, d_model, T), attw (B, T, T))."""
    B, d, T = tar.shape
    assert d == D_MODEL
    bt0, sub = _choose_blocking(B, T) if block_cfg is None else block_cfg
    BT = bt0 * sub                       # batch elements per grid step
    G = -(-B // BT)
    B_pad = G * BT
    R0 = bt0 * T                         # rows per sub-tile
    RR = BT * T                          # rows per grid step

    # (B, d, T) -> flattened (B_pad*T, 2d) rows [tar | src]; transpose/pad fused in jit.
    t = jnp.transpose(tar, (0, 2, 1)).astype(jnp.float32)
    s = jnp.transpose(src, (0, 2, 1)).astype(jnp.float32)
    if B_pad != B:
        pad = ((0, B_pad - B), (0, 0), (0, 0))
        t = jnp.pad(t, pad)
        s = jnp.pad(s, pad)
    ts = jnp.concatenate([t.reshape(B_pad * T, d), s.reshape(B_pad * T, d)], axis=1)

    # fused block-diagonal projection weight / bias (q-scale folded in)
    scale = 1.0 / math.sqrt(HEAD_DIM)
    zd = jnp.zeros((d, d), jnp.float32)
    wqkv = jnp.concatenate(
        [jnp.concatenate([params["wq"] * scale, zd, zd], axis=1),
         jnp.concatenate([zd, params["wk"], params["wv"]], axis=1)], axis=0)    # (2d, 3d)
    bqkv = jnp.concatenate([params["bq"] * scale, params["bk"], params["bv"]], axis=1)
    vecs = jnp.concatenate(
        [params["bo"], params["b2"], params["g1"], params["be1"],
         params["g2"], params["be2"], jnp.zeros((2, d), jnp.float32)], axis=0)   # (8, d)

    # precomputed constants (hoisted out of the kernel per review)
    rb = jnp.arange(R0) // T
    mask_add = jnp.where(rb[:, None] == rb[None, :], 0.0, -1e30).astype(jnp.float32)  # (R0,R0)
    kpos = jnp.arange(R0) % T
    sum_mat_t = jnp.where(jnp.arange(T)[:, None] == kpos[None, :],
                          1.0 / NHEAD, 0.0).astype(jnp.float32)                       # (T, R0)
    hsel = (jnp.arange(d)[None, :] // HEAD_DIM
            == jnp.arange(NHEAD)[:, None]).astype(jnp.float32)                        # (NHEAD, d)

    weights = [wqkv, params["wo"], params["w1"], params["w2"], vecs, bqkv, params["b1"],
               mask_add, sum_mat_t, hsel]

    kernel = functools.partial(cross_attention_kernel, sub=sub, r0=R0, seq=T)
    in_specs = [pl.BlockSpec((RR, 2 * d), lambda g: (g, 0))]
    in_specs += [_const_spec(w.shape) for w in weights]

    out_slab, attw_slab = pl.pallas_call(
        kernel,
        out_shape=(jax.ShapeDtypeStruct((G, d, RR), jnp.float32),
                   jax.ShapeDtypeStruct((G, T, RR), jnp.float32)),
        grid=(G,),
        in_specs=in_specs,
        out_specs=(pl.BlockSpec((1, d, RR), lambda g: (g, 0, 0)),
                   pl.BlockSpec((1, T, RR), lambda g: (g, 0, 0))),
        compiler_params=pltpu.CompilerParams(dimension_semantics=("parallel",)),
    )(ts, *weights)

    # Un-mangle the lane-dense slabs back to the public layout (layout plumbing only).
    out = out_slab.reshape(G, d, BT, T).transpose(0, 2, 1, 3).reshape(B_pad, d, T)[:B]
    attw = attw_slab.reshape(G, T, BT, T).transpose(0, 2, 3, 1).reshape(B_pad, T, T)[:B]
    return out, attw


def init_params(key):
    ks = jax.random.split(key, 8)
    sd = 0.05
    return {
        # attention projections, stored as (d_in, d_out) so kernel does x @ W
        "wq": jax.random.normal(ks[0], (D_MODEL, D_MODEL), jnp.float32) * sd,
        "wk": jax.random.normal(ks[1], (D_MODEL, D_MODEL), jnp.float32) * sd,
        "wv": jax.random.normal(ks[2], (D_MODEL, D_MODEL), jnp.float32) * sd,
        "bq": jax.random.normal(ks[3], (1, D_MODEL), jnp.float32) * sd,
        "bk": jnp.zeros((1, D_MODEL), jnp.float32),
        "bv": jnp.zeros((1, D_MODEL), jnp.float32),
        "wo": jax.random.normal(ks[4], (D_MODEL, D_MODEL), jnp.float32) * sd,
        "bo": jnp.zeros((1, D_MODEL), jnp.float32),
        # FFN
        "w1": jax.random.normal(ks[5], (D_MODEL, FFN_DIM), jnp.float32) * sd,
        "b1": jnp.zeros((1, FFN_DIM), jnp.float32),
        "w2": jax.random.normal(ks[6], (FFN_DIM, D_MODEL), jnp.float32) * sd,
        "b2": jnp.zeros((1, D_MODEL), jnp.float32),
        # LayerNorm affine params (PyTorch default init)
        "g1": jnp.ones((1, D_MODEL), jnp.float32),
        "be1": jnp.zeros((1, D_MODEL), jnp.float32),
        "g2": jnp.ones((1, D_MODEL), jnp.float32),
        "be2": jnp.zeros((1, D_MODEL), jnp.float32),
    }


def reference(tar, src, p):
    """Pure-JAX replica of the PyTorch forward (eval mode) for verification."""
    t = jnp.transpose(tar, (0, 2, 1))
    s = jnp.transpose(src, (0, 2, 1))
    B, T, d = t.shape
    q = t @ p["wq"] + p["bq"]
    k = s @ p["wk"] + p["bk"]
    v = s @ p["wv"] + p["bv"]
    qh = q.reshape(B, T, NHEAD, HEAD_DIM).transpose(0, 2, 1, 3)
    kh = k.reshape(B, T, NHEAD, HEAD_DIM).transpose(0, 2, 1, 3)
    vh = v.reshape(B, T, NHEAD, HEAD_DIM).transpose(0, 2, 1, 3)
    scores = (qh @ kh.transpose(0, 1, 3, 2)) / jnp.sqrt(jnp.float32(HEAD_DIM))
    att = jax.nn.softmax(scores, axis=-1)
    ctx = (att @ vh).transpose(0, 2, 1, 3).reshape(B, T, d)
    attw = jnp.mean(att, axis=1)
    attn_out = ctx @ p["wo"] + p["bo"]
    x = _layernorm(s + attn_out, p["g1"], p["be1"])
    y = jnp.maximum(x @ p["w1"] + p["b1"], 0.0) @ p["w2"] + p["b2"]
    x = _layernorm(x + y, p["g2"], p["be2"])
    return jnp.transpose(x, (0, 2, 1)), attw


def _check(fn, params, key, B, T, tag):
    k1, k2 = jax.random.split(key)
    tar = jax.random.normal(k1, (B, D_MODEL, T), jnp.float32)
    src = jax.random.normal(k2, (B, D_MODEL, T), jnp.float32)
    out, attw = fn(tar, src, params)
    out = jax.block_until_ready(out)
    attw = jax.block_until_ready(attw)
    ref_out, ref_attw = reference(tar, src, params)
    assert out.shape == (B, D_MODEL, T) and attw.shape == (B, T, T), tag
    assert jnp.allclose(out, ref_out, atol=1e-3, rtol=1e-3), tag
    assert jnp.allclose(attw, ref_attw, atol=1e-3, rtol=1e-3), tag


if __name__ == "__main__":
    key = jax.random.PRNGKey(0)
    k_a, k_b, k_c, k_par = jax.random.split(key, 4)
    params = init_params(k_par)
    fn = jax.jit(cross_attention)

    # Small case: whole batch folds into a single grid step (B=2, T=8 -> 16-row block).
    _check(fn, params, k_a, B=2, T=8, tag="small")

    # Larger batch: 128-row sub-tiles, multi-step grid (G=2) and batch padding.
    _check(fn, params, k_b, B=20, T=8, tag="batched")

    # Even larger batch: exercises multi-sub-tile steps (sub=2 -> 256-row blocks, G=2).
    _check(fn, params, k_c, B=40, T=8, tag="multi-subtile")

    # TODO(synk): dropout / dropout1 / dropout2 are treated as identity (eval-mode semantics).
    print("KERNEL_OK")
</pallas_src>

<mosaic_0001>
module attributes {stable_mosaic.version = 11 : i64} {
  func.func @cross_attention_kernel(%arg0: i32, %arg1: memref<16x64xf32, #tpu.memory_space<vmem>>, %arg2: memref<64x96xf32, #tpu.memory_space<vmem>>, %arg3: memref<32x32xf32, #tpu.memory_space<vmem>>, %arg4: memref<32x128xf32, #tpu.memory_space<vmem>>, %arg5: memref<128x32xf32, #tpu.memory_space<vmem>>, %arg6: memref<8x32xf32, #tpu.memory_space<vmem>>, %arg7: memref<1x96xf32, #tpu.memory_space<vmem>>, %arg8: memref<1x128xf32, #tpu.memory_space<vmem>>, %arg9: memref<16x16xf32, #tpu.memory_space<vmem>>, %arg10: memref<8x16xf32, #tpu.memory_space<vmem>>, %arg11: memref<4x32xf32, #tpu.memory_space<vmem>>, %arg12: memref<1x32x16xf32, #tpu.memory_space<vmem>>, %arg13: memref<1x8x16xf32, #tpu.memory_space<vmem>>) attributes {dimension_semantics = [#tpu.dimension_semantics<parallel>], iteration_bounds = array<i64: 1>, scalar_prefetch = 0 : i64, scratch_operands = 0 : i64, tpu.core_type = #tpu.core_type<tc>, window_params = [{transform_indices = @transform_0, window_bounds = array<i64: 16, 64>}, {pipeline_mode = #tpu.pipeline_mode<synchronous>, transform_indices = @transform_1, window_bounds = array<i64: 64, 96>}, {pipeline_mode = #tpu.pipeline_mode<synchronous>, transform_indices = @transform_2, window_bounds = array<i64: 32, 32>}, {pipeline_mode = #tpu.pipeline_mode<synchronous>, transform_indices = @transform_3, window_bounds = array<i64: 32, 128>}, {pipeline_mode = #tpu.pipeline_mode<synchronous>, transform_indices = @transform_4, window_bounds = array<i64: 128, 32>}, {pipeline_mode = #tpu.pipeline_mode<synchronous>, transform_indices = @transform_5, window_bounds = array<i64: 8, 32>}, {pipeline_mode = #tpu.pipeline_mode<synchronous>, transform_indices = @transform_6, window_bounds = array<i64: 1, 96>}, {pipeline_mode = #tpu.pipeline_mode<synchronous>, transform_indices = @transform_7, window_bounds = array<i64: 1, 128>}, {pipeline_mode = #tpu.pipeline_mode<synchronous>, transform_indices = @transform_8, window_bounds = array<i64: 16, 16>}, {pipeline_mode = #tpu.pipeline_mode<synchronous>, transform_indices = @transform_9, window_bounds = array<i64: 8, 16>}, {pipeline_mode = #tpu.pipeline_mode<synchronous>, transform_indices = @transform_10, window_bounds = array<i64: 4, 32>}, {transform_indices = @transform_11, window_bounds = array<i64: 1, 32, 16>}, {transform_indices = @transform_12, window_bounds = array<i64: 1, 8, 16>}]} {
    %c0 = arith.constant 0 : index
    %c0_0 = arith.constant 0 : index
    %0 = vector.load %arg1[%c0, %c0_0] : memref<16x64xf32, #tpu.memory_space<vmem>>, vector<16x64xf32>
    %1 = vector.extract_strided_slice %0 {offsets = [0, 32], sizes = [16, 32], strides = [1, 1]} : vector<16x64xf32> to vector<16x32xf32>
    %c0_1 = arith.constant 0 : index
    %c0_2 = arith.constant 0 : index
    %2 = vector.load %arg6[%c0_1, %c0_2] : memref<8x32xf32, #tpu.memory_space<vmem>>, vector<1x32xf32>
    %c1 = arith.constant 1 : index
    %c0_3 = arith.constant 0 : index
    %3 = vector.load %arg6[%c1, %c0_3] : memref<8x32xf32, #tpu.memory_space<vmem>>, vector<1x32xf32>
    %c2 = arith.constant 2 : index
    %c0_4 = arith.constant 0 : index
    %4 = vector.load %arg6[%c2, %c0_4] : memref<8x32xf32, #tpu.memory_space<vmem>>, vector<1x32xf32>
    %c3 = arith.constant 3 : index
    %c0_5 = arith.constant 0 : index
    %5 = vector.load %arg6[%c3, %c0_5] : memref<8x32xf32, #tpu.memory_space<vmem>>, vector<1x32xf32>
    %c4 = arith.constant 4 : index
    %c0_6 = arith.constant 0 : index
    %6 = vector.load %arg6[%c4, %c0_6] : memref<8x32xf32, #tpu.memory_space<vmem>>, vector<1x32xf32>
    %c5 = arith.constant 5 : index
    %c0_7 = arith.constant 0 : index
    %7 = vector.load %arg6[%c5, %c0_7] : memref<8x32xf32, #tpu.memory_space<vmem>>, vector<1x32xf32>
    %c0_8 = arith.constant 0 : index
    %c0_9 = arith.constant 0 : index
    %8 = vector.load %arg2[%c0_8, %c0_9] : memref<64x96xf32, #tpu.memory_space<vmem>>, vector<64x96xf32>
    %cst = arith.constant dense<0.000000e+00> : vector<16x96xf32>
    %9 = tpu.matmul %0, %8, %cst {dimension_numbers = #tpu.dot_dimension_numbers<[1], [0], [0], [1], [0, 0, 1, 1], [], []>} : vector<16x64xf32>, vector<64x96xf32>, vector<16x96xf32> -> vector<16x96xf32>
    %c0_10 = arith.constant 0 : index
    %c0_11 = arith.constant 0 : index
    %10 = vector.load %arg7[%c0_10, %c0_11] : memref<1x96xf32, #tpu.memory_space<vmem>>, vector<1x96xf32>
    %11 = vector.broadcast %10 : vector<1x96xf32> to vector<16x96xf32>
    %12 = arith.addf %9, %11 : vector<16x96xf32>
    %13 = vector.extract_strided_slice %12 {offsets = [0, 0], sizes = [16, 32], strides = [1, 1]} : vector<16x96xf32> to vector<16x32xf32>
    %14 = vector.extract_strided_slice %12 {offsets = [0, 32], sizes = [16, 32], strides = [1, 1]} : vector<16x96xf32> to vector<16x32xf32>
    %15 = vector.extract_strided_slice %12 {offsets = [0, 64], sizes = [16, 32], strides = [1, 1]} : vector<16x96xf32> to vector<16x32xf32>
    %c0_12 = arith.constant 0 : index
    %c0_13 = arith.constant 0 : index
    %16 = vector.load %arg9[%c0_12, %c0_13] : memref<16x16xf32, #tpu.memory_space<vmem>>, vector<16x16xf32>
    %c0_14 = arith.constant 0 : index
    %c0_15 = arith.constant 0 : index
    %17 = vector.load %arg10[%c0_14, %c0_15] : memref<8x16xf32, #tpu.memory_space<vmem>>, vector<8x16xf32>
    %c0_16 = arith.constant 0 : index
    %c0_17 = arith.constant 0 : index
    %18 = vector.load %arg11[%c0_16, %c0_17] : memref<4x32xf32, #tpu.memory_space<vmem>>, vector<4x32xf32>
    %cst_18 = arith.constant 0.000000e+00 : f32
    %19 = vector.broadcast %cst_18 : f32 to vector<16x32xf32>
    %cst_19 = arith.constant 0.000000e+00 : f32
    %20 = vector.broadcast %cst_19 : f32 to vector<8x16xf32>
    %21 = vector.extract_strided_slice %18 {offsets = [0, 0], sizes = [1, 32], strides = [1, 1]} : vector<4x32xf32> to vector<1x32xf32>
    %22 = vector.broadcast %21 : vector<1x32xf32> to vector<16x32xf32>
    %23 = arith.mulf %13, %22 : vector<16x32xf32>
    %cst_20 = arith.constant dense<0.000000e+00> : vector<16x16xf32>
    %24 = tpu.matmul %23, %14, %cst_20 {dimension_numbers = #tpu.dot_dimension_numbers<[1], [1], [0], [0], [0, 0, 1, 0], [], []>} : vector<16x32xf32>, vector<16x32xf32>, vector<16x16xf32> -> vector<16x16xf32>
    %25 = arith.addf %24, %16 : vector<16x16xf32>
    %cst_21 = arith.constant dense<0xFF800000> : vector<16xf32>
    %26 = vector.multi_reduction <maximumf>, %25, %cst_21 [1] : vector<16x16xf32> to vector<16xf32>
    %27 = vector.shape_cast %26 : vector<16xf32> to vector<16x1xf32>
    %28 = vector.broadcast %27 : vector<16x1xf32> to vector<16x16xf32>
    %29 = arith.subf %25, %28 : vector<16x16xf32>
    %30 = math.exp %29 : vector<16x16xf32>
    %cst_22 = arith.constant dense<0.000000e+00> : vector<16xf32>
    %31 = vector.multi_reduction <add>, %30, %cst_22 [1] : vector<16x16xf32> to vector<16xf32>
    %32 = vector.shape_cast %31 : vector<16xf32> to vector<16x1xf32>
    %33 = tpu.reciprocal %32 {approx = true} : vector<16x1xf32> -> vector<16x1xf32>
    %34 = arith.mulf %32, %33 : vector<16x1xf32>
    %cst_23 = arith.constant 2.000000e+00 : f32
    %35 = vector.broadcast %cst_23 : f32 to vector<16x1xf32>
    %36 = arith.subf %35, %34 : vector<16x1xf32>
    %37 = arith.mulf %33, %36 : vector<16x1xf32>
    %38 = vector.broadcast %37 : vector<16x1xf32> to vector<16x16xf32>
    %39 = arith.mulf %30, %38 : vector<16x16xf32>
    %40 = vector.broadcast %21 : vector<1x32xf32> to vector<16x32xf32>
    %41 = arith.mulf %15, %40 : vector<16x32xf32>
    %cst_24 = arith.constant dense<0.000000e+00> : vector<16x32xf32>
    %42 = tpu.matmul %39, %41, %cst_24 {dimension_numbers = #tpu.dot_dimension_numbers<[1], [0], [0], [1], [0, 0, 1, 1], [], []>} : vector<16x16xf32>, vector<16x32xf32>, vector<16x32xf32> -> vector<16x32xf32>
    %43 = arith.addf %19, %42 : vector<16x32xf32>
    %cst_25 = arith.constant dense<0.000000e+00> : vector<8x16xf32>
    %44 = tpu.matmul %17, %39, %cst_25 {dimension_numbers = #tpu.dot_dimension_numbers<[1], [1], [0], [0], [0, 0, 1, 0], [], []>} : vector<8x16xf32>, vector<16x16xf32>, vector<8x16xf32> -> vector<8x16xf32>
    %45 = arith.addf %20, %44 : vector<8x16xf32>
    %46 = vector.extract_strided_slice %18 {offsets = [1, 0], sizes = [1, 32], strides = [1, 1]} : vector<4x32xf32> to vector<1x32xf32>
    %47 = vector.broadcast %46 : vector<1x32xf32> to vector<16x32xf32>
    %48 = arith.mulf %13, %47 : vector<16x32xf32>
    %cst_26 = arith.constant dense<0.000000e+00> : vector<16x16xf32>
    %49 = tpu.matmul %48, %14, %cst_26 {dimension_numbers = #tpu.dot_dimension_numbers<[1], [1], [0], [0], [0, 0, 1, 0], [], []>} : vector<16x32xf32>, vector<16x32xf32>, vector<16x16xf32> -> vector<16x16xf32>
    %50 = arith.addf %49, %16 : vector<16x16xf32>
    %cst_27 = arith.constant dense<0xFF800000> : vector<16xf32>
    %51 = vector.multi_reduction <maximumf>, %50, %cst_27 [1] : vector<16x16xf32> to vector<16xf32>
    %52 = vector.shape_cast %51 : vector<16xf32> to vector<16x1xf32>
    %53 = vector.broadcast %52 : vector<16x1xf32> to vector<16x16xf32>
    %54 = arith.subf %50, %53 : vector<16x16xf32>
    %55 = math.exp %54 : vector<16x16xf32>
    %cst_28 = arith.constant dense<0.000000e+00> : vector<16xf32>
    %56 = vector.multi_reduction <add>, %55, %cst_28 [1] : vector<16x16xf32> to vector<16xf32>
    %57 = vector.shape_cast %56 : vector<16xf32> to vector<16x1xf32>
    %58 = tpu.reciprocal %57 {approx = true} : vector<16x1xf32> -> vector<16x1xf32>
    %59 = arith.mulf %57, %58 : vector<16x1xf32>
    %cst_29 = arith.constant 2.000000e+00 : f32
    %60 = vector.broadcast %cst_29 : f32 to vector<16x1xf32>
    %61 = arith.subf %60, %59 : vector<16x1xf32>
    %62 = arith.mulf %58, %61 : vector<16x1xf32>
    %63 = vector.broadcast %62 : vector<16x1xf32> to vector<16x16xf32>
    %64 = arith.mulf %55, %63 : vector<16x16xf32>
    %65 = vector.broadcast %46 : vector<1x32xf32> to vector<16x32xf32>
    %66 = arith.mulf %15, %65 : vector<16x32xf32>
    %cst_30 = arith.constant dense<0.000000e+00> : vector<16x32xf32>
    %67 = tpu.matmul %64, %66, %cst_30 {dimension_numbers = #tpu.dot_dimension_numbers<[1], [0], [0], [1], [0, 0, 1, 1], [], []>} : vector<16x16xf32>, vector<16x32xf32>, vector<16x32xf32> -> vector<16x32xf32>
    %68 = arith.addf %43, %67 : vector<16x32xf32>
    %cst_31 = arith.constant dense<0.000000e+00> : vector<8x16xf32>
    %69 = tpu.matmul %17, %64, %cst_31 {dimension_numbers = #tpu.dot_dimension_numbers<[1], [1], [0], [0], [0, 0, 1, 0], [], []>} : vector<8x16xf32>, vector<16x16xf32>, vector<8x16xf32> -> vector<8x16xf32>
    %70 = arith.addf %45, %69 : vector<8x16xf32>
    %71 = vector.extract_strided_slice %18 {offsets = [2, 0], sizes = [1, 32], strides = [1, 1]} : vector<4x32xf32> to vector<1x32xf32>
    %72 = vector.broadcast %71 : vector<1x32xf32> to vector<16x32xf32>
    %73 = arith.mulf %13, %72 : vector<16x32xf32>
    %cst_32 = arith.constant dense<0.000000e+00> : vector<16x16xf32>
    %74 = tpu.matmul %73, %14, %cst_32 {dimension_numbers = #tpu.dot_dimension_numbers<[1], [1], [0], [0], [0, 0, 1, 0], [], []>} : vector<16x32xf32>, vector<16x32xf32>, vector<16x16xf32> -> vector<16x16xf32>
    %75 = arith.addf %74, %16 : vector<16x16xf32>
    %cst_33 = arith.constant dense<0xFF800000> : vector<16xf32>
    %76 = vector.multi_reduction <maximumf>, %75, %cst_33 [1] : vector<16x16xf32> to vector<16xf32>
    %77 = vector.shape_cast %76 : vector<16xf32> to vector<16x1xf32>
    %78 = vector.broadcast %77 : vector<16x1xf32> to vector<16x16xf32>
    %79 = arith.subf %75, %78 : vector<16x16xf32>
    %80 = math.exp %79 : vector<16x16xf32>
    %cst_34 = arith.constant dense<0.000000e+00> : vector<16xf32>
    %81 = vector.multi_reduction <add>, %80, %cst_34 [1] : vector<16x16xf32> to vector<16xf32>
    %82 = vector.shape_cast %81 : vector<16xf32> to vector<16x1xf32>
    %83 = tpu.reciprocal %82 {approx = true} : vector<16x1xf32> -> vector<16x1xf32>
    %84 = arith.mulf %82, %83 : vector<16x1xf32>
    %cst_35 = arith.constant 2.000000e+00 : f32
    %85 = vector.broadcast %cst_35 : f32 to vector<16x1xf32>
    %86 = arith.subf %85, %84 : vector<16x1xf32>
    %87 = arith.mulf %83, %86 : vector<16x1xf32>
    %88 = vector.broadcast %87 : vector<16x1xf32> to vector<16x16xf32>
    %89 = arith.mulf %80, %88 : vector<16x16xf32>
    %90 = vector.broadcast %71 : vector<1x32xf32> to vector<16x32xf32>
    %91 = arith.mulf %15, %90 : vector<16x32xf32>
    %cst_36 = arith.constant dense<0.000000e+00> : vector<16x32xf32>
    %92 = tpu.matmul %89, %91, %cst_36 {dimension_numbers = #tpu.dot_dimension_numbers<[1], [0], [0], [1], [0, 0, 1, 1], [], []>} : vector<16x16xf32>, vector<16x32xf32>, vector<16x32xf32> -> vector<16x32xf32>
    %93 = arith.addf %68, %92 : vector<16x32xf32>
    %cst_37 = arith.constant dense<0.000000e+00> : vector<8x16xf32>
    %94 = tpu.matmul %17, %89, %cst_37 {dimension_numbers = #tpu.dot_dimension_numbers<[1], [1], [0], [0], [0, 0, 1, 0], [], []>} : vector<8x16xf32>, vector<16x16xf32>, vector<8x16xf32> -> vector<8x16xf32>
    %95 = arith.addf %70, %94 : vector<8x16xf32>
    %96 = vector.extract_strided_slice %18 {offsets = [3, 0], sizes = [1, 32], strides = [1, 1]} : vector<4x32xf32> to vector<1x32xf32>
    %97 = vector.broadcast %96 : vector<1x32xf32> to vector<16x32xf32>
    %98 = arith.mulf %13, %97 : vector<16x32xf32>
    %cst_38 = arith.constant dense<0.000000e+00> : vector<16x16xf32>
    %99 = tpu.matmul %98, %14, %cst_38 {dimension_numbers = #tpu.dot_dimension_numbers<[1], [1], [0], [0], [0, 0, 1, 0], [], []>} : vector<16x32xf32>, vector<16x32xf32>, vector<16x16xf32> -> vector<16x16xf32>
    %100 = arith.addf %99, %16 : vector<16x16xf32>
    %cst_39 = arith.constant dense<0xFF800000> : vector<16xf32>
    %101 = vector.multi_reduction <maximumf>, %100, %cst_39 [1] : vector<16x16xf32> to vector<16xf32>
    %102 = vector.shape_cast %101 : vector<16xf32> to vector<16x1xf32>
    %103 = vector.broadcast %102 : vector<16x1xf32> to vector<16x16xf32>
    %104 = arith.subf %100, %103 : vector<16x16xf32>
    %105 = math.exp %104 : vector<16x16xf32>
    %cst_40 = arith.constant dense<0.000000e+00> : vector<16xf32>
    %106 = vector.multi_reduction <add>, %105, %cst_40 [1] : vector<16x16xf32> to vector<16xf32>
    %107 = vector.shape_cast %106 : vector<16xf32> to vector<16x1xf32>
    %108 = tpu.reciprocal %107 {approx = true} : vector<16x1xf32> -> vector<16x1xf32>
    %109 = arith.mulf %107, %108 : vector<16x1xf32>
    %cst_41 = arith.constant 2.000000e+00 : f32
    %110 = vector.broadcast %cst_41 : f32 to vector<16x1xf32>
    %111 = arith.subf %110, %109 : vector<16x1xf32>
    %112 = arith.mulf %108, %111 : vector<16x1xf32>
    %113 = vector.broadcast %112 : vector<16x1xf32> to vector<16x16xf32>
    %114 = arith.mulf %105, %113 : vector<16x16xf32>
    %115 = vector.broadcast %96 : vector<1x32xf32> to vector<16x32xf32>
    %116 = arith.mulf %15, %115 : vector<16x32xf32>
    %cst_42 = arith.constant dense<0.000000e+00> : vector<16x32xf32>
    %117 = tpu.matmul %114, %116, %cst_42 {dimension_numbers = #tpu.dot_dimension_numbers<[1], [0], [0], [1], [0, 0, 1, 1], [], []>} : vector<16x16xf32>, vector<16x32xf32>, vector<16x32xf32> -> vector<16x32xf32>
    %118 = arith.addf %93, %117 : vector<16x32xf32>
    %cst_43 = arith.constant dense<0.000000e+00> : vector<8x16xf32>
    %119 = tpu.matmul %17, %114, %cst_43 {dimension_numbers = #tpu.dot_dimension_numbers<[1], [1], [0], [0], [0, 0, 1, 0], [], []>} : vector<8x16xf32>, vector<16x16xf32>, vector<8x16xf32> -> vector<8x16xf32>
    %120 = arith.addf %95, %119 : vector<8x16xf32>
    %c0_44 = arith.constant 0 : index
    %c0_45 = arith.constant 0 : index
    %c0_46 = arith.constant 0 : index
    %121 = vector.load %arg13[%c0_44, %c0_45, %c0_46] : memref<1x8x16xf32, #tpu.memory_space<vmem>>, vector<1x8x16xf32>
    %122 = vector.shape_cast %121 : vector<1x8x16xf32> to vector<8x16xf32>
    %123 = vector.shape_cast %120 : vector<8x16xf32> to vector<1x8x16xf32>
    tpu.vector_store %arg13[%c0_44, %c0_45, %c0_46], %123 {strides = array<i32>} : memref<1x8x16xf32, #tpu.memory_space<vmem>>, vector<1x8x16xf32>,
    %c0_47 = arith.constant 0 : index
    %c0_48 = arith.constant 0 : index
    %124 = vector.load %arg3[%c0_47, %c0_48] : memref<32x32xf32, #tpu.memory_space<vmem>>, vector<32x32xf32>
    %cst_49 = arith.constant dense<0.000000e+00> : vector<16x32xf32>
    %125 = tpu.matmul %118, %124, %cst_49 {dimension_numbers = #tpu.dot_dimension_numbers<[1], [0], [0], [1], [0, 0, 1, 1], [], []>} : vector<16x32xf32>, vector<32x32xf32>, vector<16x32xf32> -> vector<16x32xf32>
    %126 = vector.broadcast %2 : vector<1x32xf32> to vector<16x32xf32>
    %127 = arith.addf %125, %126 : vector<16x32xf32>
    %128 = arith.addf %1, %127 : vector<16x32xf32>
    %cst_50 = arith.constant dense<0.000000e+00> : vector<16xf32>
    %129 = vector.multi_reduction <add>, %128, %cst_50 [1] : vector<16x32xf32> to vector<16xf32>
    %130 = vector.shape_cast %129 : vector<16xf32> to vector<16x1xf32>
    %cst_51 = arith.constant 3.200000e+01 : f32
    %131 = vector.broadcast %cst_51 : f32 to vector<16x1xf32>
    %132 = arith.divf %130, %131 : vector<16x1xf32>
    %133 = vector.broadcast %132 : vector<16x1xf32> to vector<16x32xf32>
    %134 = arith.subf %128, %133 : vector<16x32xf32>
    %135 = arith.mulf %134, %134 : vector<16x32xf32>
    %cst_52 = arith.constant dense<0.000000e+00> : vector<16xf32>
    %136 = vector.multi_reduction <add>, %135, %cst_52 [1] : vector<16x32xf32> to vector<16xf32>
    %137 = vector.shape_cast %136 : vector<16xf32> to vector<16x1xf32>
    %cst_53 = arith.constant 3.200000e+01 : f32
    %138 = vector.broadcast %cst_53 : f32 to vector<16x1xf32>
    %139 = arith.divf %137, %138 : vector<16x1xf32>
    %140 = vector.broadcast %132 : vector<16x1xf32> to vector<16x32xf32>
    %141 = arith.subf %128, %140 : vector<16x32xf32>
    %cst_54 = arith.constant 9.99999974E-6 : f32
    %142 = vector.broadcast %cst_54 : f32 to vector<16x1xf32>
    %143 = arith.addf %139, %142 : vector<16x1xf32>
    %144 = math.rsqrt %143 : vector<16x1xf32>
    %145 = vector.broadcast %144 : vector<16x1xf32> to vector<16x32xf32>
    %146 = arith.mulf %141, %145 : vector<16x32xf32>
    %147 = vector.broadcast %4 : vector<1x32xf32> to vector<16x32xf32>
    %148 = arith.mulf %146, %147 : vector<16x32xf32>
    %149 = vector.broadcast %5 : vector<1x32xf32> to vector<16x32xf32>
    %150 = arith.addf %148, %149 : vector<16x32xf32>
    %c0_55 = arith.constant 0 : index
    %c0_56 = arith.constant 0 : index
    %151 = vector.load %arg4[%c0_55, %c0_56] : memref<32x128xf32, #tpu.memory_space<vmem>>, vector<32x128xf32>
    %cst_57 = arith.constant dense<0.000000e+00> : vector<16x128xf32>
    %152 = tpu.matmul %150, %151, %cst_57 {dimension_numbers = #tpu.dot_dimension_numbers<[1], [0], [0], [1], [0, 0, 1, 1], [], []>} : vector<16x32xf32>, vector<32x128xf32>, vector<16x128xf32> -> vector<16x128xf32>
    %c0_58 = arith.constant 0 : index
    %c0_59 = arith.constant 0 : index
    %153 = vector.load %arg8[%c0_58, %c0_59] : memref<1x128xf32, #tpu.memory_space<vmem>>, vector<1x128xf32>
    %154 = vector.broadcast %153 : vector<1x128xf32> to vector<16x128xf32>
    %155 = arith.addf %152, %154 : vector<16x128xf32>
    %cst_60 = arith.constant 0.000000e+00 : f32
    %156 = vector.broadcast %cst_60 : f32 to vector<16x128xf32>
    %157 = arith.maximumf %155, %156 : vector<16x128xf32>
    %c0_61 = arith.constant 0 : index
    %c0_62 = arith.constant 0 : index
    %158 = vector.load %arg5[%c0_61, %c0_62] : memref<128x32xf32, #tpu.memory_space<vmem>>, vector<128x32xf32>
    %cst_63 = arith.constant dense<0.000000e+00> : vector<16x32xf32>
    %159 = tpu.matmul %157, %158, %cst_63 {dimension_numbers = #tpu.dot_dimension_numbers<[1], [0], [0], [1], [0, 0, 1, 1], [], []>} : vector<16x128xf32>, vector<128x32xf32>, vector<16x32xf32> -> vector<16x32xf32>
    %160 = vector.broadcast %3 : vector<1x32xf32> to vector<16x32xf32>
    %161 = arith.addf %159, %160 : vector<16x32xf32>
    %162 = arith.addf %150, %161 : vector<16x32xf32>
    %cst_64 = arith.constant dense<0.000000e+00> : vector<16xf32>
    %163 = vector.multi_reduction <add>, %162, %cst_64 [1] : vector<16x32xf32> to vector<16xf32>
    %164 = vector.shape_cast %163 : vector<16xf32> to vector<16x1xf32>
    %cst_65 = arith.constant 3.200000e+01 : f32
    %165 = vector.broadcast %cst_65 : f32 to vector<16x1xf32>
    %166 = arith.divf %164, %165 : vector<16x1xf32>
    %167 = vector.broadcast %166 : vector<16x1xf32> to vector<16x32xf32>
    %168 = arith.subf %162, %167 : vector<16x32xf32>
    %169 = arith.mulf %168, %168 : vector<16x32xf32>
    %cst_66 = arith.constant dense<0.000000e+00> : vector<16xf32>
    %170 = vector.multi_reduction <add>, %169, %cst_66 [1] : vector<16x32xf32> to vector<16xf32>
    %171 = vector.shape_cast %170 : vector<16xf32> to vector<16x1xf32>
    %cst_67 = arith.constant 3.200000e+01 : f32
    %172 = vector.broadcast %cst_67 : f32 to vector<16x1xf32>
    %173 = arith.divf %171, %172 : vector<16x1xf32>
    %174 = vector.broadcast %166 : vector<16x1xf32> to vector<16x32xf32>
    %175 = arith.subf %162, %174 : vector<16x32xf32>
    %cst_68 = arith.constant 9.99999974E-6 : f32
    %176 = vector.broadcast %cst_68 : f32 to vector<16x1xf32>
    %177 = arith.addf %173, %176 : vector<16x1xf32>
    %178 = math.rsqrt %177 : vector<16x1xf32>
    %179 = vector.broadcast %178 : vector<16x1xf32> to vector<16x32xf32>
    %180 = arith.mulf %175, %179 : vector<16x32xf32>
    %181 = vector.broadcast %6 : vector<1x32xf32> to vector<16x32xf32>
    %182 = arith.mulf %180, %181 : vector<16x32xf32>
    %183 = vector.broadcast %7 : vector<1x32xf32> to vector<16x32xf32>
    %184 = arith.addf %182, %183 : vector<16x32xf32>
    %185 = tpu.transpose %184, [1, 0] : vector<16x32xf32> -> vector<32x16xf32>
    %c0_69 = arith.constant 0 : index
    %c0_70 = arith.constant 0 : index
    %c0_71 = arith.constant 0 : index
    %186 = vector.load %arg12[%c0_69, %c0_70, %c0_71] : memref<1x32x16xf32, #tpu.memory_space<vmem>>, vector<1x32x16xf32>
    %187 = vector.shape_cast %186 : vector<1x32x16xf32> to vector<32x16xf32>
    %188 = vector.shape_cast %185 : vector<32x16xf32> to vector<1x32x16xf32>
    tpu.vector_store %arg12[%c0_69, %c0_70, %c0_71], %188 {strides = array<i32>} : memref<1x32x16xf32, #tpu.memory_space<vmem>>, vector<1x32x16xf32>,
    return
  }
  func.func @transform_0(%arg0: i32) -> (i32, i32) {
    %c0_i32 = arith.constant 0 : i32
    %c0_i32_0 = arith.constant 0 : i32
    return %arg0, %c0_i32 : i32, i32
  }
  func.func @transform_1(%arg0: i32) -> (i32, i32) {
    %c0_i32 = arith.constant 0 : i32
    %c0_i32_0 = arith.constant 0 : i32
    %c0_i32_1 = arith.constant 0 : i32
    return %c0_i32, %c0_i32_0 : i32, i32
  }
  func.func @transform_2(%arg0: i32) -> (i32, i32) {
    %c0_i32 = arith.constant 0 : i32
    %c0_i32_0 = arith.constant 0 : i32
    %c0_i32_1 = arith.constant 0 : i32
    return %c0_i32, %c0_i32_0 : i32, i32
  }
  func.func @transform_3(%arg0: i32) -> (i32, i32) {
    %c0_i32 = arith.constant 0 : i32
    %c0_i32_0 = arith.constant 0 : i32
    %c0_i32_1 = arith.constant 0 : i32
    return %c0_i32, %c0_i32_0 : i32, i32
  }
  func.func @transform_4(%arg0: i32) -> (i32, i32) {
    %c0_i32 = arith.constant 0 : i32
    %c0_i32_0 = arith.constant 0 : i32
    %c0_i32_1 = arith.constant 0 : i32
    return %c0_i32, %c0_i32_0 : i32, i32
  }
  func.func @transform_5(%arg0: i32) -> (i32, i32) {
    %c0_i32 = arith.constant 0 : i32
    %c0_i32_0 = arith.constant 0 : i32
    %c0_i32_1 = arith.constant 0 : i32
    return %c0_i32, %c0_i32_0 : i32, i32
  }
  func.func @transform_6(%arg0: i32) -> (i32, i32) {
    %c0_i32 = arith.constant 0 : i32
    %c0_i32_0 = arith.constant 0 : i32
    %c0_i32_1 = arith.constant 0 : i32
    return %c0_i32, %c0_i32_0 : i32, i32
  }
  func.func @transform_7(%arg0: i32) -> (i32, i32) {
    %c0_i32 = arith.constant 0 : i32
    %c0_i32_0 = arith.constant 0 : i32
    %c0_i32_1 = arith.constant 0 : i32
    return %c0_i32, %c0_i32_0 : i32, i32
  }
  func.func @transform_8(%arg0: i32) -> (i32, i32) {
    %c0_i32 = arith.constant 0 : i32
    %c0_i32_0 = arith.constant 0 : i32
    %c0_i32_1 = arith.constant 0 : i32
    return %c0_i32, %c0_i32_0 : i32, i32
  }
  func.func @transform_9(%arg0: i32) -> (i32, i32) {
    %c0_i32 = arith.constant 0 : i32
    %c0_i32_0 = arith.constant 0 : i32
    %c0_i32_1 = arith.constant 0 : i32
    return %c0_i32, %c0_i32_0 : i32, i32
  }
  func.func @transform_10(%arg0: i32) -> (i32, i32) {
    %c0_i32 = arith.constant 0 : i32
    %c0_i32_0 = arith.constant 0 : i32
    %c0_i32_1 = arith.constant 0 : i32
    return %c0_i32, %c0_i32_0 : i32, i32
  }
  func.func @transform_11(%arg0: i32) -> (i32, i32, i32) {
    %c0_i32 = arith.constant 0 : i32
    %c0_i32_0 = arith.constant 0 : i32
    %c0_i32_1 = arith.constant 0 : i32
    return %arg0, %c0_i32, %c0_i32_0 : i32, i32, i32
  }
  func.func @transform_12(%arg0: i32) -> (i32, i32, i32) {
    %c0_i32 = arith.constant 0 : i32
    %c0_i32_0 = arith.constant 0 : i32
    %c0_i32_1 = arith.constant 0 : i32
    return %arg0, %c0_i32, %c0_i32_0 : i32, i32, i32
  }
}

</mosaic_0001>

<llo_original>
// kernel: cross_attention.1
$region0: #{cross_attention.1}
  #allocation0 [shape = 'u32[]', space=smem, size = 0x4, offset = 0x4, fixed_abs, tag = 'smem constant byte address 0x4 - core index']
  #allocation1 [shape = 'u32[72,128]{1,0:T(1,128)}', space=vmem, size = 0x9000, scoped, tag = 'internal scratch']
  %s0 = inlined_call_operand.vmem [shape: f32[16,64], index: 0, kind: input, shape index: {}]
  %s1 = inlined_call_operand.vmem [shape: f32[64,96], index: 1, kind: input, shape index: {}]
  %s2 = inlined_call_operand.vmem [shape: f32[32,32], index: 2, kind: input, shape index: {}]
  %s3 = inlined_call_operand.vmem [shape: f32[32,128], index: 3, kind: input, shape index: {}]
  %s4 = inlined_call_operand.vmem [shape: f32[128,32], index: 4, kind: input, shape index: {}]
  %s5 = inlined_call_operand.vmem [shape: f32[8,32], index: 5, kind: input, shape index: {}]
  %s6 = inlined_call_operand.vmem [shape: f32[1,96], index: 6, kind: input, shape index: {}]
  %s7 = inlined_call_operand.vmem [shape: f32[1,128], index: 7, kind: input, shape index: {}]
  %s8 = inlined_call_operand.vmem [shape: f32[16,16], index: 8, kind: input, shape index: {}]
  %s9 = inlined_call_operand.vmem [shape: f32[8,16], index: 9, kind: input, shape index: {}]
  %s10 = inlined_call_operand.vmem [shape: f32[4,32], index: 10, kind: input, shape index: {}]
  %s11 = inlined_call_operand.vmem [shape: f32[1,32,16], index: 11, kind: output, shape index: {0}]
  %s12 = inlined_call_operand.vmem [shape: f32[1,8,16], index: 12, kind: output, shape index: {1}]
  %13 = xla_tuple %s11, %s12
  %s14 = sld [smem:[#allocation0]]
  $region62: #{cross_attention.1} parent=0
    _
  %s16 = ssub.s32 1, %s14
  %s17 = scalar_select 0, %s16, %s14
  // Predicated region
  $region2: #{cross_attention.1} parent=0 // pred_check
    _
  $region3: #{cross_attention.1} parent=0 // pred_check_branch
    %19 = sbr.rel (0) target = $region5
  $region4: #{cross_attention.1} parent=0 // pred_region
    _
  $region5: #{cross_attention.1} parent=0 // pred_fallthru
    _
  // Predicated region
  $region6: #{cross_attention.1} parent=0 // pred_check
    _
  $region7: #{cross_attention.1} parent=0 // pred_check_branch
    %21 = sbr.rel (0) target = $region9
  $region8: #{cross_attention.1} parent=0 // pred_region
    _
  $region9: #{cross_attention.1} parent=0 // pred_fallthru
    _
  // Predicated region
  $region10: #{cross_attention.1} parent=0 // pred_check
    _
  $region11: #{cross_attention.1} parent=0 // pred_check_branch
    %23 = sbr.rel (0) target = $region13
  $region12: #{cross_attention.1} parent=0 // pred_region
    _
  $region13: #{cross_attention.1} parent=0 // pred_fallthru
    _
  // Predicated region
  $region14: #{cross_attention.1} parent=0 // pred_check
    _
  $region15: #{cross_attention.1} parent=0 // pred_check_branch
    %25 = sbr.rel (0) target = $region17
  $region16: #{cross_attention.1} parent=0 // pred_region
    _
  $region17: #{cross_attention.1} parent=0 // pred_fallthru
    _
  // Predicated region
  $region18: #{cross_attention.1} parent=0 // pred_check
    _
  $region19: #{cross_attention.1} parent=0 // pred_check_branch
    %27 = sbr.rel (0) target = $region21
  $region20: #{cross_attention.1} parent=0 // pred_region
    _
  $region21: #{cross_attention.1} parent=0 // pred_fallthru
    _
  // Predicated region
  $region22: #{cross_attention.1} parent=0 // pred_check
    _
  $region23: #{cross_attention.1} parent=0 // pred_check_branch
    %29 = sbr.rel (0) target = $region25
  $region24: #{cross_attention.1} parent=0 // pred_region
    _
  $region25: #{cross_attention.1} parent=0 // pred_fallthru
    _
  // Predicated region
  $region26: #{cross_attention.1} parent=0 // pred_check
    _
  $region27: #{cross_attention.1} parent=0 // pred_check_branch
    %31 = sbr.rel (0) target = $region29
  $region28: #{cross_attention.1} parent=0 // pred_region
    _
  $region29: #{cross_attention.1} parent=0 // pred_fallthru
    _
  // Predicated region
  $region30: #{cross_attention.1} parent=0 // pred_check
    _
  $region31: #{cross_attention.1} parent=0 // pred_check_branch
    %33 = sbr.rel (0) target = $region33
  $region32: #{cross_attention.1} parent=0 // pred_region
    _
  $region33: #{cross_attention.1} parent=0 // pred_fallthru
    _
  // Predicated region
  $region34: #{cross_attention.1} parent=0 // pred_check
    _
  $region35: #{cross_attention.1} parent=0 // pred_check_branch
    %35 = sbr.rel (0) target = $region37
  $region36: #{cross_attention.1} parent=0 // pred_region
    _
  $region37: #{cross_attention.1} parent=0 // pred_fallthru
    _
  // Predicated region
  $region38: #{cross_attention.1} parent=0 // pred_check
    _
  $region39: #{cross_attention.1} parent=0 // pred_check_branch
    %37 = sbr.rel (0) target = $region41
  $region40: #{cross_attention.1} parent=0 // pred_region
    _
  $region41: #{cross_attention.1} parent=0 // pred_fallthru
    _
  // Predicated region
  $region42: #{cross_attention.1} parent=0 // pred_check
    _
  $region43: #{cross_attention.1} parent=0 // pred_check_branch
    %39 = sbr.rel (0) target = $region45
  $region44: #{cross_attention.1} parent=0 // pred_region
    _
  $region45: #{cross_attention.1} parent=0 // pred_fallthru
    _
  %v40 = vld [vmem:[%s0] sm:$0xff]
  %v41 = vld [vmem:[%s0 + $0x8] sm:$0xff]
  %v42 = vld [vmem:[%s5] sm:$0x1]
  %v43 = vld [vmem:[%s5 + $0x1] sm:$0x1]
  %v44 = vld [vmem:[%s5 + $0x2] sm:$0x1]
  %v45 = vld [vmem:[%s5 + $0x3] sm:$0x1]
  %v46 = vld [vmem:[%s5 + $0x4] sm:$0x1]
  %v47 = vld [vmem:[%s5 + $0x5] sm:$0x1]
  %v48 = vld [vmem:[%s1] sm:$0xff]
  %v49 = vld [vmem:[%s1 + $0x8] sm:$0xff]
  %v50 = vld [vmem:[%s1 + $0x10] sm:$0xff]
  %v51 = vld [vmem:[%s1 + $0x18] sm:$0xff]
  %v52 = vld [vmem:[%s1 + $0x20] sm:$0xff]
  %v53 = vld [vmem:[%s1 + $0x28] sm:$0xff]
  %v54 = vld [vmem:[%s1 + $0x30] sm:$0xff]
  %v55 = vld [vmem:[%s1 + $0x38] sm:$0xff]
  %v56 = vld [vmem:[%s6] sm:$0x1]
  %v58 = vperm.slane %v56, 0
  %vm60 = vcmask 523264
  %v62 = vsel %vm60, %v40, 0
  %v65 = vsel %vm60, %v41, 0
  %67 = vmatpush.msra.mxu0 0.0
  %68 = vmatpush.msra.mxu0 0.0
  %69 = vmatpush.msra.mxu0 0.0
  %70 = vmatpush.msra.mxu0 0.0
  %71 = vmatpush.msra.mxu0 0.0
  %72 = vmatpush.msra.mxu0 0.0
  %73 = vmatpush.msra.mxu0 0.0
  %74 = vmatpush.msra.mxu0 0.0
  %75 = vmatpush.msra.mxu0 %v55
  %76 = vmatpush.msra.mxu0 %v54
  %77 = vmatpush.msra.mxu0 %v53
  %78 = vmatpush.msra.mxu0 %v52
  %79 = vmatpush.msra.mxu0 %v51
  %80 = vmatpush.msra.mxu0 %v50
  %81 = vmatpush.msra.mxu0 %v49
  %82 = vmatpush.msra.mxu0 %v48
  %83 = vmatmul.f32.gmra.mxu0 %v62
  %v84 = vpop.f32.mrf.mxu0
  %v85 = vadd.f32 %v58, %v84
  %86 = vmatmul.f32.gmra.mxu0 %v65
  %v87 = vpop.f32.mrf.mxu0
  %v88 = vadd.f32 %v58, %v87
  %89 = vdwg.mxu0
  %v90 = vld [vmem:[%s8] sm:$0xff]
  %v91 = vld [vmem:[%s8 + $0x8] sm:$0xff]
  %v92 = vld [vmem:[%s9] sm:$0xff]
  %v93 = vld [vmem:[%s10] sm:$0xf]
  %v94 = vperm.slane %v93, 0
  %v95 = vmul.f32 %v85, %v94
  %v96 = vmul.f32 %v88, %v94
  %99 = vrot.lane.b32.xlu0 %v85, 96
  %v100 = vpop.permute.xlu0 %99
  %101 = vrot.lane.b32.xlu0 %v88, 96
  %v102 = vpop.permute.xlu0 %101
  %vm103 = vcmask 261120
  %v105 = vsel %vm103, %v95, 0
  %v108 = vsel %vm103, %v96, 0
  %v110 = vsel %vm103, %v100, 0
  %v112 = vsel %vm103, %v102, 0
  %114 = vmatpush.xpose.msra.mxu0 0.0
  %115 = vmatpush.xpose.msra.mxu0 0.0
  %116 = vmatpush.xpose.msra.mxu0 0.0
  %117 = vmatpush.xpose.msra.mxu0 0.0
  %118 = vmatpush.xpose.msra.mxu0 0.0
  %119 = vmatpush.xpose.msra.mxu0 0.0
  %120 = vmatpush.xpose.msra.mxu0 0.0
  %121 = vmatpush.xpose.msra.mxu0 0.0
  %122 = vmatpush.xpose.msra.mxu0 0.0
  %123 = vmatpush.xpose.msra.mxu0 0.0
  %124 = vmatpush.xpose.msra.mxu0 0.0
  %125 = vmatpush.xpose.msra.mxu0 0.0
  %126 = vmatpush.xpose.msra.mxu0 0.0
  %127 = vmatpush.xpose.msra.mxu0 0.0
  %128 = vmatpush.xpose.msra.mxu0 %v112
  %129 = vmatpush.xpose.msra.mxu0 %v110
  %130 = vmatmul.f32.gmra.mxu0 %v105
  %v131 = vpop.f32.mrf.mxu0
  %v132 = vadd.f32 %v90, %v131
  %133 = vmatmul.f32.gmra.mxu0 %v108
  %v134 = vpop.f32.mrf.mxu0
  %v135 = vadd.f32 %v91, %v134
  %136 = vdwg.mxu0
  %vm137 = vcmask 130048
  %v138 = vsel %vm137, %v132, -inf
  %139 = vmax.xlane.f32.xlu0 %v138
  %v140 = vpop.xlane.xlu0 %139
  %v141 = vsel %vm137, %v135, -inf
  %142 = vmax.xlane.f32.xlu0 %v141
  %v143 = vpop.xlane.xlu0 %142
  %v144 = vsub.f32 %v132, %v140
  %v145 = vsub.f32 %v135, %v143
  %v146 = vmul.f32 %v144, 1.442695
  %v147 = vpow.pop %v146
  %v148 = vmul.f32 %v145, 1.442695
  %v149 = vpow.pop %v148
  %v150 = vsel %vm137, %v147, 0.0
  %151 = vadd.xlane.f32.xlu0 %v150
  %v152 = vpop.xlane.xlu0 %151
  %v153 = vsel %vm137, %v149, 0.0
  %154 = vadd.xlane.f32.xlu0 %v153
  %v155 = vpop.xlane.xlu0 %154
  %v156 = vrcp.pop %v152
  %v157 = vrcp.pop %v155
  %v158 = vmul.f32 %v152, %v156
  %v159 = vmul.f32 %v155, %v157
  %v160 = vsub.f32 2.0, %v158
  %v161 = vsub.f32 2.0, %v159
  %v162 = vmul.f32 %v156, %v160
  %v163 = vmul.f32 %v157, %v161
  %v164 = vmul.f32 %v147, %v162
  %v165 = vmul.f32 %v149, %v163
  %167 = vrot.lane.b32.xlu0 %v94, 64
  %v168 = vpop.permute.xlu0 %167
  %v170 = vmul.f32 %v85, %v168
  %v171 = vmul.f32 %v88, %v168
  %v172 = vperm.slane %v93, 1
  %v173 = vmul.f32 %v85, %v172
  %v174 = vmul.f32 %v88, %v172
  %v176 = vsel %vm103, %v173, 0
  %v179 = vsel %vm103, %v174, 0
  %181 = vmatpush.xpose.msra.mxu0 0.0
  %182 = vmatpush.xpose.msra.mxu0 0.0
  %183 = vmatpush.xpose.msra.mxu0 0.0
  %184 = vmatpush.xpose.msra.mxu0 0.0
  %185 = vmatpush.xpose.msra.mxu0 0.0
  %186 = vmatpush.xpose.msra.mxu0 0.0
  %187 = vmatpush.xpose.msra.mxu0 0.0
  %188 = vmatpush.xpose.msra.mxu0 0.0
  %189 = vmatpush.xpose.msra.mxu0 0.0
  %190 = vmatpush.xpose.msra.mxu0 0.0
  %191 = vmatpush.xpose.msra.mxu0 0.0
  %192 = vmatpush.xpose.msra.mxu0 0.0
  %193 = vmatpush.xpose.msra.mxu0 0.0
  %194 = vmatpush.xpose.msra.mxu0 0.0
  %195 = vmatpush.xpose.msra.mxu0 %v112
  %196 = vmatpush.xpose.msra.mxu0 %v110
  %197 = vmatmul.f32.gmra.mxu0 %v176
  %v198 = vpop.f32.mrf.mxu0
  %v199 = vadd.f32 %v90, %v198
  %200 = vmatmul.f32.gmra.mxu0 %v179
  %v201 = vpop.f32.mrf.mxu0
  %v202 = vadd.f32 %v91, %v201
  %203 = vdwg.mxu0
  %v204 = vsel %vm137, %v199, -inf
  %205 = vmax.xlane.f32.xlu0 %v204
  %v206 = vpop.xlane.xlu0 %205
  %v207 = vsel %vm137, %v202, -inf
  %208 = vmax.xlane.f32.xlu0 %v207
  %v209 = vpop.xlane.xlu0 %208
  %v210 = vsub.f32 %v199, %v206
  %v211 = vsub.f32 %v202, %v209
  %v212 = vmul.f32 %v210, 1.442695
  %v213 = vpow.pop %v212
  %v214 = vmul.f32 %v211, 1.442695
  %v215 = vpow.pop %v214
  %v216 = vsel %vm137, %v213, 0.0
  %217 = vadd.xlane.f32.xlu0 %v216
  %v218 = vpop.xlane.xlu0 %217
  %v219 = vsel %vm137, %v215, 0.0
  %220 = vadd.xlane.f32.xlu0 %v219
  %v221 = vpop.xlane.xlu0 %220
  %v222 = vrcp.pop %v218
  %v223 = vrcp.pop %v221
  %v224 = vmul.f32 %v218, %v222
  %v225 = vmul.f32 %v221, %v223
  %v226 = vsub.f32 2.0, %v224
  %v227 = vsub.f32 2.0, %v225
  %v228 = vmul.f32 %v222, %v226
  %v229 = vmul.f32 %v223, %v227
  %v230 = vmul.f32 %v213, %v228
  %v231 = vmul.f32 %v215, %v229
  %233 = vrot.lane.b32.xlu0 %v172, 64
  %v234 = vpop.permute.xlu0 %233
  %v236 = vmul.f32 %v85, %v234
  %v237 = vmul.f32 %v88, %v234
  %240 = vrot.lane.b32.xlu0 %v236, 64
  %v241 = vpop.permute.xlu0 %240
  %242 = vrot.lane.b32.xlu0 %v237, 64
  %v243 = vpop.permute.xlu0 %242
  %v247 = vsel %vm137, %v230, 0
  %v250 = vsel %vm137, %v231, 0
  %252 = vmatpush.msra.mxu0 0.0
  %253 = vmatpush.msra.mxu0 0.0
  %254 = vmatpush.msra.mxu0 0.0
  %255 = vmatpush.msra.mxu0 0.0
  %256 = vmatpush.msra.mxu0 0.0
  %257 = vmatpush.msra.mxu0 0.0
  %258 = vmatpush.msra.mxu0 0.0
  %259 = vmatpush.msra.mxu0 0.0
  %260 = vmatpush.msra.mxu0 0.0
  %261 = vmatpush.msra.mxu0 0.0
  %262 = vmatpush.msra.mxu0 0.0
  %263 = vmatpush.msra.mxu0 0.0
  %264 = vmatpush.msra.mxu0 0.0
  %265 = vmatpush.msra.mxu0 0.0
  %266 = vmatpush.msra.mxu0 %v243
  %267 = vmatpush.msra.mxu0 %v241
  %268 = vmatmul.f32.gmra.mxu0 %v247
  %v269 = vpop.f32.mrf.mxu0
  %v270 = vadd.f32 0.0, %v269
  %271 = vmatmul.f32.gmra.mxu0 %v250
  %v272 = vpop.f32.mrf.mxu0
  %v273 = vadd.f32 0.0, %v272
  %274 = vdwg.mxu0
  %277 = vrot.lane.b32.xlu0 %v170, 64
  %v278 = vpop.permute.xlu0 %277
  %279 = vrot.lane.b32.xlu0 %v171, 64
  %v280 = vpop.permute.xlu0 %279
  %v284 = vsel %vm137, %v164, 0
  %v287 = vsel %vm137, %v165, 0
  %289 = vmatpush.msra.mxu0 0.0
  %290 = vmatpush.msra.mxu0 0.0
  %291 = vmatpush.msra.mxu0 0.0
  %292 = vmatpush.msra.mxu0 0.0
  %293 = vmatpush.msra.mxu0 0.0
  %294 = vmatpush.msra.mxu0 0.0
  %295 = vmatpush.msra.mxu0 0.0
  %296 = vmatpush.msra.mxu0 0.0
  %297 = vmatpush.msra.mxu0 0.0
  %298 = vmatpush.msra.mxu0 0.0
  %299 = vmatpush.msra.mxu0 0.0
  %300 = vmatpush.msra.mxu0 0.0
  %301 = vmatpush.msra.mxu0 0.0
  %302 = vmatpush.msra.mxu0 0.0
  %303 = vmatpush.msra.mxu0 %v280
  %304 = vmatpush.msra.mxu0 %v278
  %305 = vmatmul.f32.gmra.mxu0 %v284
  %v306 = vpop.f32.mrf.mxu0
  %v307 = vadd.f32 %v270, %v306
  %308 = vmatmul.f32.gmra.mxu0 %v287
  %v309 = vpop.f32.mrf.mxu0
  %v310 = vadd.f32 %v273, %v309
  %311 = vdwg.mxu0
  %v313 = vsel %vm137, %v92, 0
  %315 = vmatpush.xpose.msra.mxu0 0.0
  %316 = vmatpush.xpose.msra.mxu0 0.0
  %317 = vmatpush.xpose.msra.mxu0 0.0
  %318 = vmatpush.xpose.msra.mxu0 0.0
  %319 = vmatpush.xpose.msra.mxu0 0.0
  %320 = vmatpush.xpose.msra.mxu0 0.0
  %321 = vmatpush.xpose.msra.mxu0 0.0
  %322 = vmatpush.xpose.msra.mxu0 0.0
  %323 = vmatpush.xpose.msra.mxu0 0.0
  %324 = vmatpush.xpose.msra.mxu0 0.0
  %325 = vmatpush.xpose.msra.mxu0 0.0
  %326 = vmatpush.xpose.msra.mxu0 0.0
  %327 = vmatpush.xpose.msra.mxu0 0.0
  %328 = vmatpush.xpose.msra.mxu0 0.0
  %329 = vmatpush.xpose.msra.mxu0 %v250
  %330 = vmatpush.xpose.msra.mxu0 %v247
  %331 = vmatmul.f32.gmra.mxu0 %v313
  %v332 = vpop.f32.mrf.mxu0
  %v333 = vadd.f32 0.0, %v332
  %334 = vdwg.mxu0
  %335 = vmatpush.xpose.msra.mxu0 0.0
  %336 = vmatpush.xpose.msra.mxu0 0.0
  %337 = vmatpush.xpose.msra.mxu0 0.0
  %338 = vmatpush.xpose.msra.mxu0 0.0
  %339 = vmatpush.xpose.msra.mxu0 0.0
  %340 = vmatpush.xpose.msra.mxu0 0.0
  %341 = vmatpush.xpose.msra.mxu0 0.0
  %342 = vmatpush.xpose.msra.mxu0 0.0
  %343 = vmatpush.xpose.msra.mxu0 0.0
  %344 = vmatpush.xpose.msra.mxu0 0.0
  %345 = vmatpush.xpose.msra.mxu0 0.0
  %346 = vmatpush.xpose.msra.mxu0 0.0
  %347 = vmatpush.xpose.msra.mxu0 0.0
  %348 = vmatpush.xpose.msra.mxu0 0.0
  %349 = vmatpush.xpose.msra.mxu0 %v287
  %350 = vmatpush.xpose.msra.mxu0 %v284
  %351 = vmatmul.f32.gmra.mxu0 %v313
  %v352 = vpop.f32.mrf.mxu0
  %v353 = vadd.f32 %v333, %v352
  %354 = vdwg.mxu0
  %v355 = vperm.slane %v93, 2
  %v356 = vmul.f32 %v85, %v355
  %v357 = vmul.f32 %v88, %v355
  %v359 = vsel %vm103, %v356, 0
  %v362 = vsel %vm103, %v357, 0
  %364 = vmatpush.xpose.msra.mxu0 0.0
  %365 = vmatpush.xpose.msra.mxu0 0.0
  %366 = vmatpush.xpose.msra.mxu0 0.0
  %367 = vmatpush.xpose.msra.mxu0 0.0
  %368 = vmatpush.xpose.msra.mxu0 0.0
  %369 = vmatpush.xpose.msra.mxu0 0.0
  %370 = vmatpush.xpose.msra.mxu0 0.0
  %371 = vmatpush.xpose.msra.mxu0 0.0
  %372 = vmatpush.xpose.msra.mxu0 0.0
  %373 = vmatpush.xpose.msra.mxu0 0.0
  %374 = vmatpush.xpose.msra.mxu0 0.0
  %375 = vmatpush.xpose.msra.mxu0 0.0
  %376 = vmatpush.xpose.msra.mxu0 0.0
  %377 = vmatpush.xpose.msra.mxu0 0.0
  %378 = vmatpush.xpose.msra.mxu0 %v112
  %379 = vmatpush.xpose.msra.mxu0 %v110
  %380 = vmatmul.f32.gmra.mxu0 %v359
  %v381 = vpop.f32.mrf.mxu0
  %v382 = vadd.f32 %v90, %v381
  %383 = vmatmul.f32.gmra.mxu0 %v362
  %v384 = vpop.f32.mrf.mxu0
  %v385 = vadd.f32 %v91, %v384
  %386 = vdwg.mxu0
  %v387 = vsel %vm137, %v382, -inf
  %388 = vmax.xlane.f32.xlu0 %v387
  %v389 = vpop.xlane.xlu0 %388
  %v390 = vsel %vm137, %v385, -inf
  %391 = vmax.xlane.f32.xlu0 %v390
  %v392 = vpop.xlane.xlu0 %391
  %v393 = vsub.f32 %v382, %v389
  %v394 = vsub.f32 %v385, %v392
  %v395 = vmul.f32 %v393, 1.442695
  %v396 = vpow.pop %v395
  %v397 = vmul.f32 %v394, 1.442695
  %v398 = vpow.pop %v397
  %v399 = vsel %vm137, %v396, 0.0
  %400 = vadd.xlane.f32.xlu0 %v399
  %v401 = vpop.xlane.xlu0 %400
  %v402 = vsel %vm137, %v398, 0.0
  %403 = vadd.xlane.f32.xlu0 %v402
  %v404 = vpop.xlane.xlu0 %403
  %v405 = vrcp.pop %v401
  %v406 = vrcp.pop %v404
  %v407 = vmul.f32 %v401, %v405
  %v408 = vmul.f32 %v404, %v406
  %v409 = vsub.f32 2.0, %v407
  %v410 = vsub.f32 2.0, %v408
  %v411 = vmul.f32 %v405, %v409
  %v412 = vmul.f32 %v406, %v410
  %v413 = vmul.f32 %v396, %v411
  %v414 = vmul.f32 %v398, %v412
  %416 = vrot.lane.b32.xlu0 %v355, 64
  %v417 = vpop.permute.xlu0 %416
  %v419 = vmul.f32 %v85, %v417
  %v420 = vmul.f32 %v88, %v417
  %423 = vrot.lane.b32.xlu0 %v419, 64
  %v424 = vpop.permute.xlu0 %423
  %425 = vrot.lane.b32.xlu0 %v420, 64
  %v426 = vpop.permute.xlu0 %425
  %v430 = vsel %vm137, %v413, 0
  %v433 = vsel %vm137, %v414, 0
  %435 = vmatpush.msra.mxu0 0.0
  %436 = vmatpush.msra.mxu0 0.0
  %437 = vmatpush.msra.mxu0 0.0
  %438 = vmatpush.msra.mxu0 0.0
  %439 = vmatpush.msra.mxu0 0.0
  %440 = vmatpush.msra.mxu0 0.0
  %441 = vmatpush.msra.mxu0 0.0
  %442 = vmatpush.msra.mxu0 0.0
  %443 = vmatpush.msra.mxu0 0.0
  %444 = vmatpush.msra.mxu0 0.0
  %445 = vmatpush.msra.mxu0 0.0
  %446 = vmatpush.msra.mxu0 0.0
  %447 = vmatpush.msra.mxu0 0.0
  %448 = vmatpush.msra.mxu0 0.0
  %449 = vmatpush.msra.mxu0 %v426
  %450 = vmatpush.msra.mxu0 %v424
  %451 = vmatmul.f32.gmra.mxu0 %v430
  %v452 = vpop.f32.mrf.mxu0
  %v453 = vadd.f32 0.0, %v452
  %454 = vmatmul.f32.gmra.mxu0 %v433
  %v455 = vpop.f32.mrf.mxu0
  %v456 = vadd.f32 0.0, %v455
  %457 = vdwg.mxu0
  %v458 = vadd.f32 %v307, %v453
  %v459 = vadd.f32 %v310, %v456
  %460 = vmatpush.xpose.msra.mxu0 0.0
  %461 = vmatpush.xpose.msra.mxu0 0.0
  %462 = vmatpush.xpose.msra.mxu0 0.0
  %463 = vmatpush.xpose.msra.mxu0 0.0
  %464 = vmatpush.xpose.msra.mxu0 0.0
  %465 = vmatpush.xpose.msra.mxu0 0.0
  %466 = vmatpush.xpose.msra.mxu0 0.0
  %467 = vmatpush.xpose.msra.mxu0 0.0
  %468 = vmatpush.xpose.msra.mxu0 0.0
  %469 = vmatpush.xpose.msra.mxu0 0.0
  %470 = vmatpush.xpose.msra.mxu0 0.0
  %471 = vmatpush.xpose.msra.mxu0 0.0
  %472 = vmatpush.xpose.msra.mxu0 0.0
  %473 = vmatpush.xpose.msra.mxu0 0.0
  %474 = vmatpush.xpose.msra.mxu0 %v433
  %475 = vmatpush.xpose.msra.mxu0 %v430
  %476 = vmatmul.f32.gmra.mxu0 %v313
  %v477 = vpop.f32.mrf.mxu0
  %v478 = vadd.f32 0.0, %v477
  %479 = vdwg.mxu0
  %v480 = vadd.f32 %v353, %v478
  %v481 = vperm.slane %v93, 3
  %v482 = vmul.f32 %v85, %v481
  %v483 = vmul.f32 %v88, %v481
  %v485 = vsel %vm103, %v482, 0
  %v488 = vsel %vm103, %v483, 0
  %490 = vmatpush.xpose.msra.mxu0 0.0
  %491 = vmatpush.xpose.msra.mxu0 0.0
  %492 = vmatpush.xpose.msra.mxu0 0.0
  %493 = vmatpush.xpose.msra.mxu0 0.0
  %494 = vmatpush.xpose.msra.mxu0 0.0
  %495 = vmatpush.xpose.msra.mxu0 0.0
  %496 = vmatpush.xpose.msra.mxu0 0.0
  %497 = vmatpush.xpose.msra.mxu0 0.0
  %498 = vmatpush.xpose.msra.mxu0 0.0
  %499 = vmatpush.xpose.msra.mxu0 0.0
  %500 = vmatpush.xpose.msra.mxu0 0.0
  %501 = vmatpush.xpose.msra.mxu0 0.0
  %502 = vmatpush.xpose.msra.mxu0 0.0
  %503 = vmatpush.xpose.msra.mxu0 0.0
  %504 = vmatpush.xpose.msra.mxu0 %v112
  %505 = vmatpush.xpose.msra.mxu0 %v110
  %506 = vmatmul.f32.gmra.mxu0 %v485
  %v507 = vpop.f32.mrf.mxu0
  %v508 = vadd.f32 %v90, %v507
  %509 = vmatmul.f32.gmra.mxu0 %v488
  %v510 = vpop.f32.mrf.mxu0
  %v511 = vadd.f32 %v91, %v510
  %512 = vdwg.mxu0
  %v513 = vsel %vm137, %v508, -inf
  %514 = vmax.xlane.f32.xlu0 %v513
  %v515 = vpop.xlane.xlu0 %514
  %v516 = vsel %vm137, %v511, -inf
  %517 = vmax.xlane.f32.xlu0 %v516
  %v518 = vpop.xlane.xlu0 %517
  %v519 = vsub.f32 %v508, %v515
  %v520 = vsub.f32 %v511, %v518
  %v521 = vmul.f32 %v519, 1.442695
  %v522 = vpow.pop %v521
  %v523 = vmul.f32 %v520, 1.442695
  %v524 = vpow.pop %v523
  %v525 = vsel %vm137, %v522, 0.0
  %526 = vadd.xlane.f32.xlu0 %v525
  %v527 = vpop.xlane.xlu0 %526
  %v528 = vsel %vm137, %v524, 0.0
  %529 = vadd.xlane.f32.xlu0 %v528
  %v530 = vpop.xlane.xlu0 %529
  %v531 = vrcp.pop %v527
  %v532 = vrcp.pop %v530
  %v533 = vmul.f32 %v527, %v531
  %v534 = vmul.f32 %v530, %v532
  %v535 = vsub.f32 2.0, %v533
  %v536 = vsub.f32 2.0, %v534
  %v537 = vmul.f32 %v531, %v535
  %v538 = vmul.f32 %v532, %v536
  %v539 = vmul.f32 %v522, %v537
  %v540 = vmul.f32 %v524, %v538
  %542 = vrot.lane.b32.xlu0 %v481, 64
  %v543 = vpop.permute.xlu0 %542
  %v545 = vmul.f32 %v85, %v543
  %v546 = vmul.f32 %v88, %v543
  %549 = vrot.lane.b32.xlu0 %v545, 64
  %v550 = vpop.permute.xlu0 %549
  %551 = vrot.lane.b32.xlu0 %v546, 64
  %v552 = vpop.permute.xlu0 %551
  %v556 = vsel %vm137, %v539, 0
  %v559 = vsel %vm137, %v540, 0
  %561 = vmatpush.msra.mxu0 0.0
  %562 = vmatpush.msra.mxu0 0.0
  %563 = vmatpush.msra.mxu0 0.0
  %564 = vmatpush.msra.mxu0 0.0
  %565 = vmatpush.msra.mxu0 0.0
  %566 = vmatpush.msra.mxu0 0.0
  %567 = vmatpush.msra.mxu0 0.0
  %568 = vmatpush.msra.mxu0 0.0
  %569 = vmatpush.msra.mxu0 0.0
  %570 = vmatpush.msra.mxu0 0.0
  %571 = vmatpush.msra.mxu0 0.0
  %572 = vmatpush.msra.mxu0 0.0
  %573 = vmatpush.msra.mxu0 0.0
  %574 = vmatpush.msra.mxu0 0.0
  %575 = vmatpush.msra.mxu0 %v552
  %576 = vmatpush.msra.mxu0 %v550
  %577 = vmatmul.f32.gmra.mxu0 %v556
  %v578 = vpop.f32.mrf.mxu0
  %v579 = vadd.f32 0.0, %v578
  %580 = vmatmul.f32.gmra.mxu0 %v559
  %v581 = vpop.f32.mrf.mxu0
  %v582 = vadd.f32 0.0, %v581
  %583 = vdwg.mxu0
  %v584 = vadd.f32 %v458, %v579
  %v585 = vadd.f32 %v459, %v582
  %586 = vmatpush.xpose.msra.mxu0 0.0
  %587 = vmatpush.xpose.msra.mxu0 0.0
  %588 = vmatpush.xpose.msra.mxu0 0.0
  %589 = vmatpush.xpose.msra.mxu0 0.0
  %590 = vmatpush.xpose.msra.mxu0 0.0
  %591 = vmatpush.xpose.msra.mxu0 0.0
  %592 = vmatpush.xpose.msra.mxu0 0.0
  %593 = vmatpush.xpose.msra.mxu0 0.0
  %594 = vmatpush.xpose.msra.mxu0 0.0
  %595 = vmatpush.xpose.msra.mxu0 0.0
  %596 = vmatpush.xpose.msra.mxu0 0.0
  %597 = vmatpush.xpose.msra.mxu0 0.0
  %598 = vmatpush.xpose.msra.mxu0 0.0
  %599 = vmatpush.xpose.msra.mxu0 0.0
  %600 = vmatpush.xpose.msra.mxu0 %v559
  %601 = vmatpush.xpose.msra.mxu0 %v556
  %602 = vmatmul.f32.gmra.mxu0 %v313
  %v603 = vpop.f32.mrf.mxu0
  %v604 = vadd.f32 0.0, %v603
  %605 = vdwg.mxu0
  %v606 = vadd.f32 %v480, %v604
  %607 = vst.msk [vmem:[%s12] sm:$0xff] %vm137, %v606
  %v608 = vld [vmem:[%s2] sm:$0xff]
  %v609 = vld [vmem:[%s2 + $0x8] sm:$0xff]
  %v610 = vld [vmem:[%s2 + $0x10] sm:$0xff]
  %v611 = vld [vmem:[%s2 + $0x18] sm:$0xff]
  %v612 = vperm.slane %v42, 0
  %v614 = vsel %vm103, %v584, 0
  %v617 = vsel %vm103, %v585, 0
  %619 = vmatpush.msra.mxu0 0.0
  %620 = vmatpush.msra.mxu0 0.0
  %621 = vmatpush.msra.mxu0 0.0
  %622 = vmatpush.msra.mxu0 0.0
  %623 = vmatpush.msra.mxu0 0.0
  %624 = vmatpush.msra.mxu0 0.0
  %625 = vmatpush.msra.mxu0 0.0
  %626 = vmatpush.msra.mxu0 0.0
  %627 = vmatpush.msra.mxu0 0.0
  %628 = vmatpush.msra.mxu0 0.0
  %629 = vmatpush.msra.mxu0 0.0
  %630 = vmatpush.msra.mxu0 0.0
  %631 = vmatpush.msra.mxu0 %v611
  %632 = vmatpush.msra.mxu0 %v610
  %633 = vmatpush.msra.mxu0 %v609
  %634 = vmatpush.msra.mxu0 %v608
  %635 = vmatmul.f32.gmra.mxu0 %v614
  %v636 = vpop.f32.mrf.mxu0
  %v637 = vadd.f32 %v612, %v636
  %638 = vmatmul.f32.gmra.mxu0 %v617
  %v639 = vpop.f32.mrf.mxu0
  %v640 = vadd.f32 %v612, %v639
  %641 = vdwg.mxu0
  %644 = vrot.lane.b32.xlu0 %v637, 32
  %v645 = vpop.permute.xlu0 %644
  %646 = vrot.lane.b32.xlu0 %v640, 32
  %v647 = vpop.permute.xlu0 %646
  %v650 = vadd.f32 %v40, %v645
  %v651 = vadd.f32 %v41, %v647
  %654 = vrot.lane.b32.xlu0 %v650, 96
  %v655 = vpop.permute.xlu0 %654
  %656 = vrot.lane.b32.xlu0 %v651, 96
  %v657 = vpop.permute.xlu0 %656
  %v660 = vsel %vm103, %v655, 0.0
  %661 = vadd.xlane.f32.xlu0 %v660
  %v662 = vpop.xlane.xlu0 %661
  %v663 = vsel %vm103, %v657, 0.0
  %664 = vadd.xlane.f32.xlu0 %v663
  %v665 = vpop.xlane.xlu0 %664
  %v666 = vrcp.pop 32.0
  %v667 = vmul.f32 32.0, %v666
  %v668 = vsub.f32 1.0, %v667
  %v669 = vmul.f32 %v666, %v668
  %v670 = vadd.f32 %v666, %v669
  %vm671 = vweird.f32 %v666
  %v672 = vsel %vm671, %v666, %v670
  %v673 = vmul.f32 %v662, %v672
  %v674 = vmul.f32 %v665, %v672
  %v675 = vsub.f32 %v650, %v673
  %v676 = vsub.f32 %v651, %v674
  %v677 = vmul.f32 %v675, %v675
  %v678 = vmul.f32 %v676, %v676
  %681 = vrot.lane.b32.xlu0 %v677, 96
  %v682 = vpop.permute.xlu0 %681
  %683 = vrot.lane.b32.xlu0 %v678, 96
  %v684 = vpop.permute.xlu0 %683
  %v687 = vsel %vm103, %v682, 0.0
  %688 = vadd.xlane.f32.xlu0 %v687
  %v689 = vpop.xlane.xlu0 %688
  %v690 = vsel %vm103, %v684, 0.0
  %691 = vadd.xlane.f32.xlu0 %v690
  %v692 = vpop.xlane.xlu0 %691
  %v693 = vmul.f32 %v689, %v672
  %v694 = vmul.f32 %v692, %v672
  %v695 = vadd.f32 %v693, 1e-05
  %v696 = vadd.f32 %v694, 1e-05
  %v697 = vrsqrt.pop %v695
  %v698 = vmul.f32 %v697, %v695
  %v699 = vmul.f32 %v698, %v697
  %v700 = vmul.f32 0.5, %v699
  %v701 = vsub.f32 1.5, %v700
  %v702 = vmul.f32 %v697, %v701
  %vm703 = vweird.f32 %v695
  %vm704 = vweird.f32 %v697
  %vm705 = vmor %vm703, %vm704
  %v706 = vsel %vm705, %v697, %v702
  %v707 = vrsqrt.pop %v696
  %v708 = vmul.f32 %v707, %v696
  %v709 = vmul.f32 %v708, %v707
  %v710 = vmul.f32 0.5, %v709
  %v711 = vsub.f32 1.5, %v710
  %v712 = vmul.f32 %v707, %v711
  %vm713 = vweird.f32 %v696
  %vm714 = vweird.f32 %v707
  %vm715 = vmor %vm713, %vm714
  %v716 = vsel %vm715, %v707, %v712
  %v717 = vmul.f32 %v675, %v706
  %v718 = vmul.f32 %v676, %v716
  %v719 = vperm.slane %v44, 0
  %721 = vrot.lane.b32.xlu0 %v719, 32
  %v722 = vpop.permute.xlu0 %721
  %v724 = vmul.f32 %v717, %v722
  %v725 = vmul.f32 %v718, %v722
  %v726 = vperm.slane %v45, 0
  %728 = vrot.lane.b32.xlu0 %v726, 32
  %v729 = vpop.permute.xlu0 %728
  %v731 = vadd.f32 %v724, %v729
  %v732 = vadd.f32 %v725, %v729
  %v733 = vld [vmem:[%s3] sm:$0xff]
  %v734 = vld [vmem:[%s3 + $0x8] sm:$0xff]
  %v735 = vld [vmem:[%s3 + $0x10] sm:$0xff]
  %v736 = vld [vmem:[%s3 + $0x18] sm:$0xff]
  %v737 = vld [vmem:[%s7] sm:$0x1]
  %v739 = vperm.slane %v737, 0
  %743 = vrot.lane.b32.xlu0 %v731, 96
  %v744 = vpop.permute.xlu0 %743
  %745 = vrot.lane.b32.xlu0 %v732, 96
  %v746 = vpop.permute.xlu0 %745
  %v747 = vsel %vm103, %v744, 0
  %v749 = vsel %vm103, %v746, 0
  %751 = vmatpush.msra.mxu0 0.0
  %752 = vmatpush.msra.mxu0 0.0
  %753 = vmatpush.msra.mxu0 0.0
  %754 = vmatpush.msra.mxu0 0.0
  %755 = vmatpush.msra.mxu0 0.0
  %756 = vmatpush.msra.mxu0 0.0
  %757 = vmatpush.msra.mxu0 0.0
  %758 = vmatpush.msra.mxu0 0.0
  %759 = vmatpush.msra.mxu0 0.0
  %760 = vmatpush.msra.mxu0 0.0
  %761 = vmatpush.msra.mxu0 0.0
  %762 = vmatpush.msra.mxu0 0.0
  %763 = vmatpush.msra.mxu0 %v736
  %764 = vmatpush.msra.mxu0 %v735
  %765 = vmatpush.msra.mxu0 %v734
  %766 = vmatpush.msra.mxu0 %v733
  %767 = vmatmul.f32.gmra.mxu0 %v747
  %v768 = vpop.f32.mrf.mxu0
  %v769 = vadd.f32 %v739, %v768
  %770 = vmatmul.f32.gmra.mxu0 %v749
  %v771 = vpop.f32.mrf.mxu0
  %v772 = vadd.f32 %v739, %v771
  %773 = vdwg.mxu0
  %v774 = vmax.f32 %v769, 0.0
  %v775 = vmax.f32 %v772, 0.0
  %v776 = vld [vmem:[%s4] sm:$0xff]
  %v777 = vld [vmem:[%s4 + $0x8] sm:$0xff]
  %v778 = vld [vmem:[%s4 + $0x10] sm:$0xff]
  %v779 = vld [vmem:[%s4 + $0x18] sm:$0xff]
  %v780 = vld [vmem:[%s4 + $0x20] sm:$0xff]
  %v781 = vld [vmem:[%s4 + $0x28] sm:$0xff]
  %v782 = vld [vmem:[%s4 + $0x30] sm:$0xff]
  %v783 = vld [vmem:[%s4 + $0x38] sm:$0xff]
  %v784 = vld [vmem:[%s4 + $0x40] sm:$0xff]
  %v785 = vld [vmem:[%s4 + $0x48] sm:$0xff]
  %v786 = vld [vmem:[%s4 + $0x50] sm:$0xff]
  %v787 = vld [vmem:[%s4 + $0x58] sm:$0xff]
  %v788 = vld [vmem:[%s4 + $0x60] sm:$0xff]
  %v789 = vld [vmem:[%s4 + $0x68] sm:$0xff]
  %v790 = vld [vmem:[%s4 + $0x70] sm:$0xff]
  %v791 = vld [vmem:[%s4 + $0x78] sm:$0xff]
  %v792 = vperm.slane %v43, 0
  %793 = vmatpush.msra.mxu0 %v791
  %794 = vmatpush.msra.mxu0 %v790
  %795 = vmatpush.msra.mxu0 %v789
  %796 = vmatpush.msra.mxu0 %v788
  %797 = vmatpush.msra.mxu0 %v787
  %798 = vmatpush.msra.mxu0 %v786
  %799 = vmatpush.msra.mxu0 %v785
  %800 = vmatpush.msra.mxu0 %v784
  %801 = vmatpush.msra.mxu0 %v783
  %802 = vmatpush.msra.mxu0 %v782
  %803 = vmatpush.msra.mxu0 %v781
  %804 = vmatpush.msra.mxu0 %v780
  %805 = vmatpush.msra.mxu0 %v779
  %806 = vmatpush.msra.mxu0 %v778
  %807 = vmatpush.msra.mxu0 %v777
  %808 = vmatpush.msra.mxu0 %v776
  %809 = vmatmul.f32.gmra.mxu0 %v774
  %v810 = vpop.f32.mrf.mxu0
  %v811 = vadd.f32 %v792, %v810
  %812 = vmatmul.f32.gmra.mxu0 %v775
  %v813 = vpop.f32.mrf.mxu0
  %v814 = vadd.f32 %v792, %v813
  %815 = vdwg.mxu0
  %818 = vrot.lane.b32.xlu0 %v811, 32
  %v819 = vpop.permute.xlu0 %818
  %820 = vrot.lane.b32.xlu0 %v814, 32
  %v821 = vpop.permute.xlu0 %820
  %v824 = vadd.f32 %v731, %v819
  %v825 = vadd.f32 %v732, %v821
  %828 = vrot.lane.b32.xlu0 %v824, 96
  %v829 = vpop.permute.xlu0 %828
  %830 = vrot.lane.b32.xlu0 %v825, 96
  %v831 = vpop.permute.xlu0 %830
  %v834 = vsel %vm103, %v829, 0.0
  %835 = vadd.xlane.f32.xlu0 %v834
  %v836 = vpop.xlane.xlu0 %835
  %v837 = vsel %vm103, %v831, 0.0
  %838 = vadd.xlane.f32.xlu0 %v837
  %v839 = vpop.xlane.xlu0 %838
  %v840 = vmul.f32 %v836, %v672
  %v841 = vmul.f32 %v839, %v672
  %v842 = vsub.f32 %v824, %v840
  %v843 = vsub.f32 %v825, %v841
  %v844 = vmul.f32 %v842, %v842
  %v845 = vmul.f32 %v843, %v843
  %848 = vrot.lane.b32.xlu0 %v844, 96
  %v849 = vpop.permute.xlu0 %848
  %850 = vrot.lane.b32.xlu0 %v845, 96
  %v851 = vpop.permute.xlu0 %850
  %v854 = vsel %vm103, %v849, 0.0
  %855 = vadd.xlane.f32.xlu0 %v854
  %v856 = vpop.xlane.xlu0 %855
  %v857 = vsel %vm103, %v851, 0.0
  %858 = vadd.xlane.f32.xlu0 %v857
  %v859 = vpop.xlane.xlu0 %858
  %v860 = vmul.f32 %v856, %v672
  %v861 = vmul.f32 %v859, %v672
  %v862 = vadd.f32 %v860, 1e-05
  %v863 = vadd.f32 %v861, 1e-05
  %v864 = vrsqrt.pop %v862
  %v865 = vmul.f32 %v864, %v862
  %v866 = vmul.f32 %v865, %v864
  %v867 = vmul.f32 0.5, %v866
  %v868 = vsub.f32 1.5, %v867
  %v869 = vmul.f32 %v864, %v868
  %vm870 = vweird.f32 %v862
  %vm871 = vweird.f32 %v864
  %vm872 = vmor %vm870, %vm871
  %v873 = vsel %vm872, %v864, %v869
  %v874 = vrsqrt.pop %v863
  %v875 = vmul.f32 %v874, %v863
  %v876 = vmul.f32 %v875, %v874
  %v877 = vmul.f32 0.5, %v876
  %v878 = vsub.f32 1.5, %v877
  %v879 = vmul.f32 %v874, %v878
  %vm880 = vweird.f32 %v863
  %vm881 = vweird.f32 %v874
  %vm882 = vmor %vm880, %vm881
  %v883 = vsel %vm882, %v874, %v879
  %v884 = vmul.f32 %v842, %v873
  %v885 = vmul.f32 %v843, %v883
  %v886 = vperm.slane %v46, 0
  %888 = vrot.lane.b32.xlu0 %v886, 32
  %v889 = vpop.permute.xlu0 %888
  %v891 = vmul.f32 %v884, %v889
  %v892 = vmul.f32 %v885, %v889
  %v893 = vperm.slane %v47, 0
  %895 = vrot.lane.b32.xlu0 %v893, 32
  %v896 = vpop.permute.xlu0 %895
  %v898 = vadd.f32 %v891, %v896
  %v899 = vadd.f32 %v892, %v896
  %902 = vrot.lane.b32.xlu0 %v898, 96
  %v903 = vpop.permute.xlu0 %902
  %904 = vrot.lane.b32.xlu0 %v899, 96
  %v905 = vpop.permute.xlu0 %904
  %908 = vxpose.xlu0.b32.start [1/16] %v903, 128
  %909 = vxpose.xlu0.b32.cont [2/16] %v905, 128
  %910 = vxpose.xlu0.b32.cont [3/16] 0.0, 128
  %911 = vxpose.xlu0.b32.cont [4/16] 0.0, 128
  %912 = vxpose.xlu0.b32.cont [5/16] 0.0, 128
  %913 = vxpose.xlu0.b32.cont [6/16] 0.0, 128
  %914 = vxpose.xlu0.b32.cont [7/16] 0.0, 128
  %915 = vxpose.xlu0.b32.cont [8/16] 0.0, 128
  %916 = vxpose.xlu0.b32.cont [9/16] 0.0, 128
  %917 = vxpose.xlu0.b32.cont [10/16] 0.0, 128
  %918 = vxpose.xlu0.b32.cont [11/16] 0.0, 128
  %919 = vxpose.xlu0.b32.cont [12/16] 0.0, 128
  %920 = vxpose.xlu0.b32.cont [13/16] 0.0, 128
  %921 = vxpose.xlu0.b32.cont [14/16] 0.0, 128
  %922 = vxpose.xlu0.b32.cont [15/16] 0.0, 128
  %923 = vxpose.xlu0.b32.end [16/16] 0.0, 128
  %v924 = vpop.trf.xlu0
  %v925 = vpop.trf.xlu0
  %v926 = vpop.trf.xlu0
  %v927 = vpop.trf.xlu0
  %v928 = vpop.trf.xlu0
  %v929 = vpop.trf.xlu0
  %v930 = vpop.trf.xlu0
  %v931 = vpop.trf.xlu0
  %v932 = vpop.trf.xlu0
  %v933 = vpop.trf.xlu0
  %v934 = vpop.trf.xlu0
  %v935 = vpop.trf.xlu0
  %v936 = vpop.trf.xlu0
  %v937 = vpop.trf.xlu0
  %v938 = vpop.trf.xlu0
  %v939 = vpop.trf.xlu0
  %940 = vst.msk [vmem:[%s11] sm:$0xff] %vm137, %v924
  %941 = vst.msk [vmem:[%s11 + $0x8] sm:$0xff] %vm137, %v925
  %942 = vst.msk [vmem:[%s11 + $0x10] sm:$0xff] %vm137, %v926
  %943 = vst.msk [vmem:[%s11 + $0x18] sm:$0xff] %vm137, %v927
  // Predicated region
  $region46: #{cross_attention.1} parent=0 // pred_check
    _
  $region47: #{cross_attention.1} parent=0 // pred_check_branch
    %945 = sbr.rel (0) target = $region49
  $region48: #{cross_attention.1} parent=0 // pred_region
    _
  $region49: #{cross_attention.1} parent=0 // pred_fallthru
    _
  // Predicated region
  $region50: #{cross_attention.1} parent=0 // pred_check
    _
  $region51: #{cross_attention.1} parent=0 // pred_check_branch
    %947 = sbr.rel (0) target = $region53
  $region52: #{cross_attention.1} parent=0 // pred_region
    _
  $region53: #{cross_attention.1} parent=0 // pred_fallthru
    _
  // Predicated region
  $region54: #{cross_attention.1} parent=0 // pred_check
    _
  $region55: #{cross_attention.1} parent=0 // pred_check_branch
    %949 = sbr.rel (0) target = $region57
  $region56: #{cross_attention.1} parent=0 // pred_region
    _
  $region57: #{cross_attention.1} parent=0 // pred_fallthru
    _
  // Predicated region
  $region58: #{cross_attention.1} parent=0 // pred_check
    _
  $region59: #{cross_attention.1} parent=0 // pred_check_branch
    %951 = sbr.rel (0) target = $region61
  $region60: #{cross_attention.1} parent=0 // pred_region
    _
  $region61: #{cross_attention.1} parent=0 // pred_fallthru
    _

</llo_original>
